<compile_context>
chip_gen: v7x
topology: tpu7x:2x2x1
jax: 0.10.0
libtpu: 0.0.40
codegen_flags: <defaults>
</compile_context>

<pallas_src>
import jax
import jax.numpy as jnp
from jax.experimental import pallas as pl
from jax.experimental.pallas import tpu as pltpu

LN_EPS = 1e-5  # PyTorch nn.LayerNorm default


def _round_up(x, m):
    return ((x + m - 1) // m) * m


def _choose_tile(batch):
    """Pick (TB, padded_batch).

    Small batches: one tile covering the whole (8-padded) batch -> grid=(1,).
    Large batches: TB in [128, 1024], multiple of 128 (keeps the lane-dense
    (1, TB) output block legal), and >= 2 grid steps so megacore "parallel"
    can split work across v7x's two TensorCores.
    """
    pb8 = _round_up(max(batch, 1), 8)
    if pb8 <= 128:
        return pb8, pb8
    tb = min(1024, _round_up(-(-pb8 // 2), 128))
    pb = _round_up(pb8, tb)
    return tb, pb


def _layernorm(x, gamma, beta):
    """Two-pass LayerNorm (biased variance, matches nn.LayerNorm)."""
    h = x.shape[-1]
    inv_h = 1.0 / h
    mu = jnp.sum(x, axis=-1, keepdims=True) * inv_h
    xc = x - mu
    var = jnp.sum(xc * xc, axis=-1, keepdims=True) * inv_h
    return xc * jax.lax.rsqrt(var + LN_EPS) * gamma + beta


def critic_kernel(xa_ref, w_in_ref, w_h_ref, w_a_ref, p1_ref, p2_ref, out_ref):
    din = w_in_ref.shape[0]  # static: input_dims

    # Unpack the stacked parameter rows (static sublane slices, f32).
    b_in = p1_ref[0:1, :]
    g_i = p1_ref[1:2, :]
    be_i = p1_ref[2:3, :]

    b_h = p2_ref[0:1, :]
    g_h = p2_ref[1:2, :]
    be_h = p2_ref[2:3, :]
    b_a = p2_ref[3:4, :]
    w_c = p2_ref[4:5, :]        # critic_output weight as a (1, hl_two) row
    b_c = p2_ref[5:6, 0:1]      # critic_output bias (scalar)

    xa = xa_ref[...]            # single merged (TB, Din+Na) tile
    state = xa[:, :din]
    action = xa[:, din:]

    # state_value = relu(lnormi(input(state)))
    h1 = jnp.dot(state, w_in_ref[...], preferred_element_type=jnp.float32) + b_in
    h1 = _layernorm(h1, g_i, be_i)
    h1 = jnp.maximum(h1, 0.0)

    # state_value = lnormh(hidden(state_value))
    h2 = jnp.dot(h1.astype(w_h_ref.dtype), w_h_ref[...],
                 preferred_element_type=jnp.float32) + b_h
    h2 = _layernorm(h2, g_h, be_h)

    # action_value = action_output(action)
    av = jnp.dot(action, w_a_ref[...], preferred_element_type=jnp.float32) + b_a

    # state_action_value = critic_output(relu(state_value + action_value))
    sav = jnp.maximum(h2 + av, 0.0)

    # Lane-dense head: contract hl_two with w_c as the (1, K) LHS so the
    # result lands directly as a (1, TB) row (unmasked vector stores).
    scores = jax.lax.dot_general(
        w_c, sav, dimension_numbers=(((1,), (1,)), ((), ())),
        preferred_element_type=jnp.float32)
    out_ref[...] = scores + b_c


def pack_params(params, matmul_dtype=jnp.bfloat16):
    """One-time packing: weight casts + the ten tiny (1,H) rows -> p1/p2."""
    hl_two = params["w_h"].shape[1]
    return {
        "w_in": params["w_in"].astype(matmul_dtype),
        "w_h": params["w_h"].astype(matmul_dtype),
        "w_a": params["w_a"].astype(matmul_dtype),
        "p1": jnp.concatenate(
            [params["b_in"], params["g_i"], params["be_i"]], axis=0
        ).astype(jnp.float32),
        "p2": jnp.concatenate(
            [params["b_h"], params["g_h"], params["be_h"], params["b_a"],
             params["w_c"], jnp.broadcast_to(params["b_c"], (1, hl_two))],
            axis=0,
        ).astype(jnp.float32),
    }


@jax.jit
def critic_forward(state, action, packed):
    B, input_dims = state.shape
    n_actions = action.shape[1]
    hl_one = packed["w_in"].shape[1]
    hl_two = packed["w_h"].shape[1]
    mdtype = packed["w_in"].dtype
    d_in = input_dims + n_actions

    TB, pb = _choose_tile(B)

    # One merged activation tile (single input DMA per grid step).
    xa = jnp.concatenate([state, action], axis=1).astype(mdtype)
    if pb != B:
        xa = jnp.pad(xa, ((0, pb - B), (0, 0)))

    grid = (pb // TB,)
    flops = 2 * pb * (input_dims * hl_one + hl_one * hl_two
                      + n_actions * hl_two + hl_two)
    bytes_accessed = (xa.size * xa.dtype.itemsize
                      + packed["w_in"].nbytes + packed["w_h"].nbytes
                      + packed["w_a"].nbytes + packed["p1"].nbytes
                      + packed["p2"].nbytes + pb * 4)

    out = pl.pallas_call(
        critic_kernel,
        out_shape=jax.ShapeDtypeStruct((1, pb), jnp.float32),
        grid_spec=pltpu.PrefetchScalarGridSpec(
            num_scalar_prefetch=0,
            grid=grid,
            in_specs=[
                # Batch-tiled merged activations.
                pl.BlockSpec((TB, d_in), lambda i: (i, 0)),
                # Weights / packed params: constant block -> VMEM resident.
                pl.BlockSpec((input_dims, hl_one), lambda i: (0, 0)),
                pl.BlockSpec((hl_one, hl_two), lambda i: (0, 0)),
                pl.BlockSpec((n_actions, hl_two), lambda i: (0, 0)),
                pl.BlockSpec((3, hl_one), lambda i: (0, 0)),
                pl.BlockSpec((6, hl_two), lambda i: (0, 0)),
            ],
            # Lane-dense output row per batch tile.
            out_specs=pl.BlockSpec((1, TB), lambda i: (0, i)),
        ),
        compiler_params=pltpu.CompilerParams(
            dimension_semantics=("parallel",),
        ),
        cost_estimate=pl.CostEstimate(
            flops=flops,
            transcendentals=2 * pb,      # two rsqrt per batch row
            bytes_accessed=bytes_accessed,
        ),
    )(xa, packed["w_in"], packed["w_h"], packed["w_a"],
      packed["p1"], packed["p2"])

    return out.reshape(pb, 1)[:B]


def init_params(key, input_dims, n_actions, hl_one, hl_two):
    """Deterministic init mirroring the PyTorch module's __init__ scheme."""
    ks = jax.random.split(key, 8)

    def uni(k, shape, bound):
        return jax.random.uniform(k, shape, jnp.float32, -bound, bound)

    # PyTorch code: fan_in = 1/sqrt(weight.size(0)) == 1/sqrt(out_features)
    f_in = 1.0 / jnp.sqrt(hl_one)
    f_h = 1.0 / jnp.sqrt(hl_two)
    f_a = 1.0 / jnp.sqrt(hl_two)
    f_c = 0.003

    return {
        # Linear weights stored as (in_features, out_features) for y = x @ W + b
        "w_in": uni(ks[0], (input_dims, hl_one), f_in),
        "b_in": uni(ks[1], (1, hl_one), f_in),
        "g_i": jnp.ones((1, hl_one), jnp.float32),
        "be_i": jnp.zeros((1, hl_one), jnp.float32),
        "w_h": uni(ks[2], (hl_one, hl_two), f_h),
        "b_h": uni(ks[3], (1, hl_two), f_h),
        "g_h": jnp.ones((1, hl_two), jnp.float32),
        "be_h": jnp.zeros((1, hl_two), jnp.float32),
        "w_a": uni(ks[4], (n_actions, hl_two), f_a),
        "b_a": uni(ks[5], (1, hl_two), f_a),
        # critic_output weight kept as PyTorch-shaped (1, hl_two) row.
        "w_c": uni(ks[6], (1, hl_two), f_c),
        "b_c": uni(ks[7], (1, 1), f_c),
    }


def reference_forward(state, action, p):
    """Pure-JAX (f32) reference of the PyTorch forward."""
    h1 = state @ p["w_in"] + p["b_in"]
    h1 = _layernorm(h1, p["g_i"], p["be_i"])
    h1 = jnp.maximum(h1, 0.0)
    h2 = _layernorm(h1 @ p["w_h"] + p["b_h"], p["g_h"], p["be_h"])
    av = action @ p["w_a"] + p["b_a"]
    sav = jnp.maximum(h2 + av, 0.0)
    return sav @ p["w_c"].T + p["b_c"]


# TODO(synk): checkpoint save/load, Adam optimizer state and device routing
# from the PyTorch module are host-side plumbing with no kernel equivalent.

if __name__ == "__main__":
    # LunarLanderContinuous-like sizes, kept small.
    batch = 8
    input_dims = 8     # observation dim
    n_actions = 2
    hl_one = 64
    hl_two = 32

    key = jax.random.PRNGKey(0)
    k_state, k_action, k_params, k_s2, k_a2, k_s3, k_a3 = jax.random.split(key, 7)

    state = jax.random.normal(k_state, (batch, input_dims), jnp.float32)
    action = jax.random.uniform(k_action, (batch, n_actions), jnp.float32, -1.0, 1.0)
    params = init_params(k_params, input_dims, n_actions, hl_one, hl_two)

    # Pre-pack once (hoisted out of the per-call path).
    packed_f32 = pack_params(params, matmul_dtype=jnp.float32)
    packed_bf16 = pack_params(params, matmul_dtype=jnp.bfloat16)   # default path

    ref = reference_forward(state, action, params)

    # 1) f32 MXU operands — tight check against the reference.
    out_f32 = jax.block_until_ready(critic_forward(state, action, packed_f32))
    assert out_f32.shape == (batch, 1)
    assert jnp.allclose(out_f32, ref, atol=1e-4, rtol=1e-4), "f32 mismatch vs reference"

    # 2) bf16 MXU operands (default; bf16 MXU is native on v5e/v6e/v7x),
    #    f32 accumulation & LayerNorm — looser tolerance.
    out_bf16 = jax.block_until_ready(critic_forward(state, action, packed_bf16))
    assert out_bf16.shape == (batch, 1)
    assert jnp.allclose(out_bf16, ref, atol=5e-3, rtol=5e-2), "bf16 mismatch vs reference"

    # 3) Ragged batch (not a multiple of 8) exercises the pad + slice path.
    b2 = 13
    state2 = jax.random.normal(k_s2, (b2, input_dims), jnp.float32)
    action2 = jax.random.uniform(k_a2, (b2, n_actions), jnp.float32, -1.0, 1.0)
    out2 = jax.block_until_ready(critic_forward(state2, action2, packed_f32))
    ref2 = reference_forward(state2, action2, params)
    assert out2.shape == (b2, 1)
    assert jnp.allclose(out2, ref2, atol=1e-4, rtol=1e-4), "ragged-batch mismatch"

    # 4) Larger batch forces a multi-step grid (TB=128, grid=(2,)) — exercises
    #    megacore-shardable tiling, padded rows, and multi-block lane-dense out.
    b3 = 200
    state3 = jax.random.normal(k_s3, (b3, input_dims), jnp.float32)
    action3 = jax.random.uniform(k_a3, (b3, n_actions), jnp.float32, -1.0, 1.0)
    out3 = jax.block_until_ready(critic_forward(state3, action3, packed_f32))
    ref3 = reference_forward(state3, action3, params)
    assert out3.shape == (b3, 1)
    assert jnp.allclose(out3, ref3, atol=1e-4, rtol=1e-4), "multi-tile mismatch"

    print("KERNEL_OK")
</pallas_src>

<mosaic_0001>
module attributes {stable_mosaic.version = 11 : i64} {
  func.func @critic_kernel(%arg0: i32, %arg1: memref<8x10xf32, #tpu.memory_space<vmem>>, %arg2: memref<8x64xf32, #tpu.memory_space<vmem>>, %arg3: memref<64x32xf32, #tpu.memory_space<vmem>>, %arg4: memref<2x32xf32, #tpu.memory_space<vmem>>, %arg5: memref<3x64xf32, #tpu.memory_space<vmem>>, %arg6: memref<6x32xf32, #tpu.memory_space<vmem>>, %arg7: memref<1x8xf32, #tpu.memory_space<vmem>>) attributes {dimension_semantics = [#tpu.dimension_semantics<parallel>], iteration_bounds = array<i64: 1>, scalar_prefetch = 0 : i64, scratch_operands = 0 : i64, tpu.core_type = #tpu.core_type<tc>, window_params = [{transform_indices = @transform_0, window_bounds = array<i64: 8, 10>}, {pipeline_mode = #tpu.pipeline_mode<synchronous>, transform_indices = @transform_1, window_bounds = array<i64: 8, 64>}, {pipeline_mode = #tpu.pipeline_mode<synchronous>, transform_indices = @transform_2, window_bounds = array<i64: 64, 32>}, {pipeline_mode = #tpu.pipeline_mode<synchronous>, transform_indices = @transform_3, window_bounds = array<i64: 2, 32>}, {pipeline_mode = #tpu.pipeline_mode<synchronous>, transform_indices = @transform_4, window_bounds = array<i64: 3, 64>}, {pipeline_mode = #tpu.pipeline_mode<synchronous>, transform_indices = @transform_5, window_bounds = array<i64: 6, 32>}, {transform_indices = @transform_6, window_bounds = array<i64: 1, 8>}]} {
    %c0 = arith.constant 0 : index
    %c0_0 = arith.constant 0 : index
    %0 = vector.load %arg5[%c0, %c0_0] : memref<3x64xf32, #tpu.memory_space<vmem>>, vector<1x64xf32>
    %c1 = arith.constant 1 : index
    %c0_1 = arith.constant 0 : index
    %1 = vector.load %arg5[%c1, %c0_1] : memref<3x64xf32, #tpu.memory_space<vmem>>, vector<1x64xf32>
    %c2 = arith.constant 2 : index
    %c0_2 = arith.constant 0 : index
    %2 = vector.load %arg5[%c2, %c0_2] : memref<3x64xf32, #tpu.memory_space<vmem>>, vector<1x64xf32>
    %c0_3 = arith.constant 0 : index
    %c0_4 = arith.constant 0 : index
    %3 = vector.load %arg6[%c0_3, %c0_4] : memref<6x32xf32, #tpu.memory_space<vmem>>, vector<1x32xf32>
    %c1_5 = arith.constant 1 : index
    %c0_6 = arith.constant 0 : index
    %4 = vector.load %arg6[%c1_5, %c0_6] : memref<6x32xf32, #tpu.memory_space<vmem>>, vector<1x32xf32>
    %c2_7 = arith.constant 2 : index
    %c0_8 = arith.constant 0 : index
    %5 = vector.load %arg6[%c2_7, %c0_8] : memref<6x32xf32, #tpu.memory_space<vmem>>, vector<1x32xf32>
    %c3 = arith.constant 3 : index
    %c0_9 = arith.constant 0 : index
    %6 = vector.load %arg6[%c3, %c0_9] : memref<6x32xf32, #tpu.memory_space<vmem>>, vector<1x32xf32>
    %c4 = arith.constant 4 : index
    %c0_10 = arith.constant 0 : index
    %7 = vector.load %arg6[%c4, %c0_10] : memref<6x32xf32, #tpu.memory_space<vmem>>, vector<1x32xf32>
    %c5 = arith.constant 5 : index
    %c0_11 = arith.constant 0 : index
    %8 = vector.load %arg6[%c5, %c0_11] : memref<6x32xf32, #tpu.memory_space<vmem>>, vector<1x1xf32>
    %c0_12 = arith.constant 0 : index
    %c0_13 = arith.constant 0 : index
    %9 = vector.load %arg1[%c0_12, %c0_13] : memref<8x10xf32, #tpu.memory_space<vmem>>, vector<8x10xf32>
    %10 = vector.extract_strided_slice %9 {offsets = [0, 0], sizes = [8, 8], strides = [1, 1]} : vector<8x10xf32> to vector<8x8xf32>
    %11 = vector.extract_strided_slice %9 {offsets = [0, 8], sizes = [8, 2], strides = [1, 1]} : vector<8x10xf32> to vector<8x2xf32>
    %c0_14 = arith.constant 0 : index
    %c0_15 = arith.constant 0 : index
    %12 = vector.load %arg2[%c0_14, %c0_15] : memref<8x64xf32, #tpu.memory_space<vmem>>, vector<8x64xf32>
    %cst = arith.constant dense<0.000000e+00> : vector<8x64xf32>
    %13 = tpu.matmul %10, %12, %cst {dimension_numbers = #tpu.dot_dimension_numbers<[1], [0], [0], [1], [0, 0, 1, 1], [], []>} : vector<8x8xf32>, vector<8x64xf32>, vector<8x64xf32> -> vector<8x64xf32>
    %14 = vector.broadcast %0 : vector<1x64xf32> to vector<8x64xf32>
    %15 = arith.addf %13, %14 : vector<8x64xf32>
    %cst_16 = arith.constant dense<0.000000e+00> : vector<8xf32>
    %16 = vector.multi_reduction <add>, %15, %cst_16 [1] : vector<8x64xf32> to vector<8xf32>
    %17 = vector.shape_cast %16 : vector<8xf32> to vector<8x1xf32>
    %cst_17 = arith.constant 1.562500e-02 : f32
    %18 = vector.broadcast %cst_17 : f32 to vector<8x1xf32>
    %19 = arith.mulf %17, %18 : vector<8x1xf32>
    %20 = vector.broadcast %19 : vector<8x1xf32> to vector<8x64xf32>
    %21 = arith.subf %15, %20 : vector<8x64xf32>
    %22 = arith.mulf %21, %21 : vector<8x64xf32>
    %cst_18 = arith.constant dense<0.000000e+00> : vector<8xf32>
    %23 = vector.multi_reduction <add>, %22, %cst_18 [1] : vector<8x64xf32> to vector<8xf32>
    %24 = vector.shape_cast %23 : vector<8xf32> to vector<8x1xf32>
    %cst_19 = arith.constant 1.562500e-02 : f32
    %25 = vector.broadcast %cst_19 : f32 to vector<8x1xf32>
    %26 = arith.mulf %24, %25 : vector<8x1xf32>
    %cst_20 = arith.constant 9.99999974E-6 : f32
    %27 = vector.broadcast %cst_20 : f32 to vector<8x1xf32>
    %28 = arith.addf %26, %27 : vector<8x1xf32>
    %29 = math.rsqrt %28 : vector<8x1xf32>
    %30 = vector.broadcast %29 : vector<8x1xf32> to vector<8x64xf32>
    %31 = arith.mulf %21, %30 : vector<8x64xf32>
    %32 = vector.broadcast %1 : vector<1x64xf32> to vector<8x64xf32>
    %33 = arith.mulf %31, %32 : vector<8x64xf32>
    %34 = vector.broadcast %2 : vector<1x64xf32> to vector<8x64xf32>
    %35 = arith.addf %33, %34 : vector<8x64xf32>
    %cst_21 = arith.constant 0.000000e+00 : f32
    %36 = vector.broadcast %cst_21 : f32 to vector<8x64xf32>
    %37 = arith.maximumf %35, %36 : vector<8x64xf32>
    %c0_22 = arith.constant 0 : index
    %c0_23 = arith.constant 0 : index
    %38 = vector.load %arg3[%c0_22, %c0_23] : memref<64x32xf32, #tpu.memory_space<vmem>>, vector<64x32xf32>
    %cst_24 = arith.constant dense<0.000000e+00> : vector<8x32xf32>
    %39 = tpu.matmul %37, %38, %cst_24 {dimension_numbers = #tpu.dot_dimension_numbers<[1], [0], [0], [1], [0, 0, 1, 1], [], []>} : vector<8x64xf32>, vector<64x32xf32>, vector<8x32xf32> -> vector<8x32xf32>
    %40 = vector.broadcast %3 : vector<1x32xf32> to vector<8x32xf32>
    %41 = arith.addf %39, %40 : vector<8x32xf32>
    %cst_25 = arith.constant dense<0.000000e+00> : vector<8xf32>
    %42 = vector.multi_reduction <add>, %41, %cst_25 [1] : vector<8x32xf32> to vector<8xf32>
    %43 = vector.shape_cast %42 : vector<8xf32> to vector<8x1xf32>
    %cst_26 = arith.constant 3.125000e-02 : f32
    %44 = vector.broadcast %cst_26 : f32 to vector<8x1xf32>
    %45 = arith.mulf %43, %44 : vector<8x1xf32>
    %46 = vector.broadcast %45 : vector<8x1xf32> to vector<8x32xf32>
    %47 = arith.subf %41, %46 : vector<8x32xf32>
    %48 = arith.mulf %47, %47 : vector<8x32xf32>
    %cst_27 = arith.constant dense<0.000000e+00> : vector<8xf32>
    %49 = vector.multi_reduction <add>, %48, %cst_27 [1] : vector<8x32xf32> to vector<8xf32>
    %50 = vector.shape_cast %49 : vector<8xf32> to vector<8x1xf32>
    %cst_28 = arith.constant 3.125000e-02 : f32
    %51 = vector.broadcast %cst_28 : f32 to vector<8x1xf32>
    %52 = arith.mulf %50, %51 : vector<8x1xf32>
    %cst_29 = arith.constant 9.99999974E-6 : f32
    %53 = vector.broadcast %cst_29 : f32 to vector<8x1xf32>
    %54 = arith.addf %52, %53 : vector<8x1xf32>
    %55 = math.rsqrt %54 : vector<8x1xf32>
    %56 = vector.broadcast %55 : vector<8x1xf32> to vector<8x32xf32>
    %57 = arith.mulf %47, %56 : vector<8x32xf32>
    %58 = vector.broadcast %4 : vector<1x32xf32> to vector<8x32xf32>
    %59 = arith.mulf %57, %58 : vector<8x32xf32>
    %60 = vector.broadcast %5 : vector<1x32xf32> to vector<8x32xf32>
    %61 = arith.addf %59, %60 : vector<8x32xf32>
    %c0_30 = arith.constant 0 : index
    %c0_31 = arith.constant 0 : index
    %62 = vector.load %arg4[%c0_30, %c0_31] : memref<2x32xf32, #tpu.memory_space<vmem>>, vector<2x32xf32>
    %cst_32 = arith.constant dense<0.000000e+00> : vector<8x32xf32>
    %63 = tpu.matmul %11, %62, %cst_32 {dimension_numbers = #tpu.dot_dimension_numbers<[1], [0], [0], [1], [0, 0, 1, 1], [], []>} : vector<8x2xf32>, vector<2x32xf32>, vector<8x32xf32> -> vector<8x32xf32>
    %64 = vector.broadcast %6 : vector<1x32xf32> to vector<8x32xf32>
    %65 = arith.addf %63, %64 : vector<8x32xf32>
    %66 = arith.addf %61, %65 : vector<8x32xf32>
    %cst_33 = arith.constant 0.000000e+00 : f32
    %67 = vector.broadcast %cst_33 : f32 to vector<8x32xf32>
    %68 = arith.maximumf %66, %67 : vector<8x32xf32>
    %cst_34 = arith.constant dense<0.000000e+00> : vector<1x8xf32>
    %69 = tpu.matmul %7, %68, %cst_34 {dimension_numbers = #tpu.dot_dimension_numbers<[1], [1], [0], [0], [0, 0, 1, 0], [], []>} : vector<1x32xf32>, vector<8x32xf32>, vector<1x8xf32> -> vector<1x8xf32>
    %70 = vector.broadcast %8 : vector<1x1xf32> to vector<1x8xf32>
    %71 = arith.addf %69, %70 : vector<1x8xf32>
    %c0_35 = arith.constant 0 : index
    %c0_36 = arith.constant 0 : index
    %72 = vector.load %arg7[%c0_35, %c0_36] : memref<1x8xf32, #tpu.memory_space<vmem>>, vector<1x8xf32>
    tpu.vector_store %arg7[%c0_35, %c0_36], %71 {strides = array<i32>} : memref<1x8xf32, #tpu.memory_space<vmem>>, vector<1x8xf32>,
    return
  }
  func.func @transform_0(%arg0: i32) -> (i32, i32) {
    %c0_i32 = arith.constant 0 : i32
    %c0_i32_0 = arith.constant 0 : i32
    return %arg0, %c0_i32 : i32, i32
  }
  func.func @transform_1(%arg0: i32) -> (i32, i32) {
    %c0_i32 = arith.constant 0 : i32
    %c0_i32_0 = arith.constant 0 : i32
    %c0_i32_1 = arith.constant 0 : i32
    return %c0_i32, %c0_i32_0 : i32, i32
  }
  func.func @transform_2(%arg0: i32) -> (i32, i32) {
    %c0_i32 = arith.constant 0 : i32
    %c0_i32_0 = arith.constant 0 : i32
    %c0_i32_1 = arith.constant 0 : i32
    return %c0_i32, %c0_i32_0 : i32, i32
  }
  func.func @transform_3(%arg0: i32) -> (i32, i32) {
    %c0_i32 = arith.constant 0 : i32
    %c0_i32_0 = arith.constant 0 : i32
    %c0_i32_1 = arith.constant 0 : i32
    return %c0_i32, %c0_i32_0 : i32, i32
  }
  func.func @transform_4(%arg0: i32) -> (i32, i32) {
    %c0_i32 = arith.constant 0 : i32
    %c0_i32_0 = arith.constant 0 : i32
    %c0_i32_1 = arith.constant 0 : i32
    return %c0_i32, %c0_i32_0 : i32, i32
  }
  func.func @transform_5(%arg0: i32) -> (i32, i32) {
    %c0_i32 = arith.constant 0 : i32
    %c0_i32_0 = arith.constant 0 : i32
    %c0_i32_1 = arith.constant 0 : i32
    return %c0_i32, %c0_i32_0 : i32, i32
  }
  func.func @transform_6(%arg0: i32) -> (i32, i32) {
    %c0_i32 = arith.constant 0 : i32
    %c0_i32_0 = arith.constant 0 : i32
    return %c0_i32, %arg0 : i32, i32
  }
}

</mosaic_0001>

<llo_original>
// kernel: critic_forward.1
$region0: #{critic_forward.1}
  #allocation0 [shape = 'u32[]', space=smem, size = 0x4, offset = 0x4, fixed_abs, tag = 'smem constant byte address 0x4 - core index']
  #allocation1 [shape = 'u32[144,128]{1,0:T(1,128)}', space=vmem, size = 0x12000, scoped, tag = 'internal scratch']
  %s0 = inlined_call_operand.vmem [shape: f32[8,10], index: 0, kind: input, shape index: {}]
  %s1 = inlined_call_operand.vmem [shape: f32[8,64], index: 1, kind: input, shape index: {}]
  %s2 = inlined_call_operand.vmem [shape: f32[64,32], index: 2, kind: input, shape index: {}]
  %s3 = inlined_call_operand.vmem [shape: f32[2,32], index: 3, kind: input, shape index: {}]
  %s4 = inlined_call_operand.vmem [shape: f32[3,64], index: 4, kind: input, shape index: {}]
  %s5 = inlined_call_operand.vmem [shape: f32[6,32], index: 5, kind: input, shape index: {}]
  %s6 = inlined_call_operand.hbm [shape: f32[1,8], index: 6, kind: output, shape index: {}]
  %s7 = sld [smem:[#allocation0]]
  $region34: #{critic_forward.1} parent=0
    _
  %s9 = ssub.s32 1, %s7
  %s10 = scalar_select 0, %s9, %s7
  $region1: #{critic_forward.1} parent=0
    #allocation2 [shape = 'u8[512]{0}', space=vmem, size = 0x400, scoped, tag = 'output window, operand 0, single buffered']
    #allocation3 [shape = 's32[1]{0}', space=sflag, size = 0x4, scoped, tag = 'scoped memory for critic_forward.1']
    %11 = vsyncpa [#allocation3], 0
    // Predicated region
    $region2: #{critic_forward.1} parent=1 // pred_check
      _
    $region3: #{critic_forward.1} parent=1 // pred_check_branch
      %13 = sbr.rel (0) target = $region5
    $region4: #{critic_forward.1} parent=1 // pred_region
      _
    $region5: #{critic_forward.1} parent=1 // pred_fallthru
      _
    // Predicated region
    $region6: #{critic_forward.1} parent=1 // pred_check
      _
    $region7: #{critic_forward.1} parent=1 // pred_check_branch
      %15 = sbr.rel (0) target = $region9
    $region8: #{critic_forward.1} parent=1 // pred_region
      _
    $region9: #{critic_forward.1} parent=1 // pred_fallthru
      _
    // Predicated region
    $region10: #{critic_forward.1} parent=1 // pred_check
      _
    $region11: #{critic_forward.1} parent=1 // pred_check_branch
      %17 = sbr.rel (0) target = $region13
    $region12: #{critic_forward.1} parent=1 // pred_region
      _
    $region13: #{critic_forward.1} parent=1 // pred_fallthru
      _
    // Predicated region
    $region14: #{critic_forward.1} parent=1 // pred_check
      _
    $region15: #{critic_forward.1} parent=1 // pred_check_branch
      %19 = sbr.rel (0) target = $region17
    $region16: #{critic_forward.1} parent=1 // pred_region
      _
    $region17: #{critic_forward.1} parent=1 // pred_fallthru
      _
    // Predicated region
    $region18: #{critic_forward.1} parent=1 // pred_check
      _
    $region19: #{critic_forward.1} parent=1 // pred_check_branch
      %21 = sbr.rel (0) target = $region21
    $region20: #{critic_forward.1} parent=1 // pred_region
      _
    $region21: #{critic_forward.1} parent=1 // pred_fallthru
      _
    // Predicated region
    $region22: #{critic_forward.1} parent=1 // pred_check
      _
    $region23: #{critic_forward.1} parent=1 // pred_check_branch
      %23 = sbr.rel (0) target = $region25
    $region24: #{critic_forward.1} parent=1 // pred_region
      _
    $region25: #{critic_forward.1} parent=1 // pred_fallthru
      _
    %v24 = vld [vmem:[%s4] sm:$0x1]
    %v25 = vld [vmem:[%s4 + $0x1] sm:$0x1]
    %v26 = vld [vmem:[%s4 + $0x2] sm:$0x1]
    %v27 = vld [vmem:[%s5] sm:$0x1]
    %v28 = vld [vmem:[%s5 + $0x1] sm:$0x1]
    %v29 = vld [vmem:[%s5 + $0x2] sm:$0x1]
    %v30 = vld [vmem:[%s5 + $0x3] sm:$0x1]
    %v31 = vld [vmem:[%s5 + $0x4] sm:$0x1]
    %v32 = vld [vmem:[%s5 + $0x5] sm:$0x1]
    %v33 = vld [vmem:[%s0] sm:$0xff]
    %v34 = vld [vmem:[%s1] sm:$0xff]
    %v35 = vlaneseq
    %v36 = vshrl.u32 %v35, 7
    %v37 = vsub.s32 0, %v36
    %v38 = vrot.slane %v24, %v37
    %vm39 = vcmask 64512
    %v41 = vsel %vm39, %v33, 0
    %43 = vmatprep.subr.mxu0 0.0
    %44 = vmatpush1.msra.mxu0 %v34
    %45 = vmatprep.subr.mxu0 0.0
    %46 = vmatpush1.msra.mxu0 0.0
    %47 = vmatprep.subr.mxu0 0.0
    %48 = vmatpush1.msra.mxu0 0.0
    %49 = vmatprep.subr.mxu0 0.0
    %50 = vmatpush1.msra.mxu0 0.0
    %51 = vmatprep.subr.mxu0 0.0
    %52 = vmatpush1.msra.mxu0 0.0
    %53 = vmatprep.subr.mxu0 0.0
    %54 = vmatpush1.msra.mxu0 0.0
    %55 = vmatprep.subr.mxu0 0.0
    %56 = vmatpush1.msra.mxu0 0.0
    %57 = vmatprep.subr.mxu0 0.0
    %58 = vmatpush1.msra.mxu0 0.0
    %59 = vmatprep.subr.mxu0 0.0
    %60 = vmatpush1.msra.mxu0 0.0
    %61 = vmatprep.subr.mxu0 0.0
    %62 = vmatpush1.msra.mxu0 0.0
    %63 = vmatprep.subr.mxu0 0.0
    %64 = vmatpush1.msra.mxu0 0.0
    %65 = vmatprep.subr.mxu0 0.0
    %66 = vmatpush1.msra.mxu0 0.0
    %67 = vmatprep.subr.mxu0 0.0
    %68 = vmatpush1.msra.mxu0 0.0
    %69 = vmatprep.subr.mxu0 0.0
    %70 = vmatpush1.msra.mxu0 0.0
    %71 = vmatprep.subr.mxu0 0.0
    %72 = vmatpush1.msra.mxu0 0.0
    %73 = vmatprep.subr.mxu0 0.0
    %74 = vmatpush1.msra.mxu0 0.0
    %75 = vmatprep.subr.mxu0 0.0
    %76 = vmatpush1.msra.mxu0 0.0
    %77 = vmatprep.subr.mxu0 0.0
    %78 = vmatpush1.msra.mxu0 0.0
    %79 = vmatprep.subr.mxu0 0.0
    %80 = vmatpush1.msra.mxu0 0.0
    %81 = vmatprep.subr.mxu0 0.0
    %82 = vmatpush1.msra.mxu0 0.0
    %83 = vmatprep.subr.mxu0 0.0
    %84 = vmatpush1.msra.mxu0 0.0
    %85 = vmatprep.subr.mxu0 0.0
    %86 = vmatpush1.msra.mxu0 0.0
    %87 = vmatprep.subr.mxu0 0.0
    %88 = vmatpush1.msra.mxu0 0.0
    %89 = vmatprep.subr.mxu0 0.0
    %90 = vmatpush1.msra.mxu0 0.0
    %91 = vmatprep.subr.mxu0 0.0
    %92 = vmatpush1.msra.mxu0 0.0
    %93 = vmatprep.subr.mxu0 0.0
    %94 = vmatpush1.msra.mxu0 0.0
    %95 = vmatprep.subr.mxu0 0.0
    %96 = vmatpush1.msra.mxu0 0.0
    %97 = vmatprep.subr.mxu0 0.0
    %98 = vmatpush1.msra.mxu0 0.0
    %99 = vmatprep.subr.mxu0 0.0
    %100 = vmatpush1.msra.mxu0 0.0
    %101 = vmatprep.subr.mxu0 0.0
    %102 = vmatpush1.msra.mxu0 0.0
    %103 = vmatprep.subr.mxu0 0.0
    %104 = vmatpush1.msra.mxu0 0.0
    %105 = vmatprep.subr.mxu0 0.0
    %106 = vmatpush1.msra.mxu0 0.0
    %107 = vmatprep.mubr.f32.mxu0 0.0
    %108 = vmatmul.mubr.f32.gmra.mrb[0].mxu0 %v41
    %v109 = vpop.f32.mrb[0].mxu0
    %v110 = vadd.f32 %v38, %v109
    %v111 = vpop.f32.mrb[0].mxu0
    %112 = vdwg.mxu0
    %vm113 = vcmask 523264
    %v114 = vsel %vm113, %v110, 0.0
    %115 = vadd.xlane.f32.xlu0 %v114
    %v116 = vpop.xlane.xlu0 %115
    %v117 = vmul.f32 %v116, 0.015625
    %v118 = vsub.f32 %v110, %v117
    %v119 = vmul.f32 %v118, %v118
    %v120 = vsel %vm113, %v119, 0.0
    %121 = vadd.xlane.f32.xlu0 %v120
    %v122 = vpop.xlane.xlu0 %121
    %v123 = vmul.f32 %v122, 0.015625
    %v124 = vadd.f32 %v123, 1e-05
    %v125 = vrsqrt.pop %v124
    %v126 = vmul.f32 %v118, %v125
    %v127 = vlaneseq
    %v128 = vshrl.u32 %v127, 7
    %v129 = vsub.s32 0, %v128
    %v130 = vrot.slane %v25, %v129
    %v131 = vmul.f32 %v126, %v130
    %v132 = vlaneseq
    %v133 = vshrl.u32 %v132, 7
    %v134 = vsub.s32 0, %v133
    %v135 = vrot.slane %v26, %v134
    %v136 = vadd.f32 %v131, %v135
    %v137 = vmax.f32 %v136, 0.0
    %v138 = vld [vmem:[%s2] sm:$0xff]
    %v139 = vld [vmem:[%s2 + $0x8] sm:$0xff]
    %v140 = vld [vmem:[%s2 + $0x10] sm:$0xff]
    %v141 = vld [vmem:[%s2 + $0x18] sm:$0xff]
    %v142 = vld [vmem:[%s2 + $0x20] sm:$0xff]
    %v143 = vld [vmem:[%s2 + $0x28] sm:$0xff]
    %v144 = vld [vmem:[%s2 + $0x30] sm:$0xff]
    %v145 = vld [vmem:[%s2 + $0x38] sm:$0xff]
    %v146 = vlaneseq
    %v147 = vshrl.u32 %v146, 7
    %v148 = vsub.s32 0, %v147
    %v149 = vrot.slane %v27, %v148
    %v151 = vsel %vm113, %v137, 0
    %153 = vmatprep.subr.mxu0 0.0
    %154 = vmatpush1.msra.mxu0 %v138
    %155 = vmatprep.subr.mxu0 0.0
    %156 = vmatpush1.msra.mxu0 %v139
    %157 = vmatprep.subr.mxu0 0.0
    %158 = vmatpush1.msra.mxu0 %v140
    %159 = vmatprep.subr.mxu0 0.0
    %160 = vmatpush1.msra.mxu0 %v141
    %161 = vmatprep.subr.mxu0 0.0
    %162 = vmatpush1.msra.mxu0 %v142
    %163 = vmatprep.subr.mxu0 0.0
    %164 = vmatpush1.msra.mxu0 %v143
    %165 = vmatprep.subr.mxu0 0.0
    %166 = vmatpush1.msra.mxu0 %v144
    %167 = vmatprep.subr.mxu0 0.0
    %168 = vmatpush1.msra.mxu0 %v145
    %169 = vmatprep.subr.mxu0 0.0
    %170 = vmatpush1.msra.mxu0 0.0
    %171 = vmatprep.subr.mxu0 0.0
    %172 = vmatpush1.msra.mxu0 0.0
    %173 = vmatprep.subr.mxu0 0.0
    %174 = vmatpush1.msra.mxu0 0.0
    %175 = vmatprep.subr.mxu0 0.0
    %176 = vmatpush1.msra.mxu0 0.0
    %177 = vmatprep.subr.mxu0 0.0
    %178 = vmatpush1.msra.mxu0 0.0
    %179 = vmatprep.subr.mxu0 0.0
    %180 = vmatpush1.msra.mxu0 0.0
    %181 = vmatprep.subr.mxu0 0.0
    %182 = vmatpush1.msra.mxu0 0.0
    %183 = vmatprep.subr.mxu0 0.0
    %184 = vmatpush1.msra.mxu0 0.0
    %185 = vmatprep.subr.mxu0 0.0
    %186 = vmatpush1.msra.mxu0 0.0
    %187 = vmatprep.subr.mxu0 0.0
    %188 = vmatpush1.msra.mxu0 0.0
    %189 = vmatprep.subr.mxu0 0.0
    %190 = vmatpush1.msra.mxu0 0.0
    %191 = vmatprep.subr.mxu0 0.0
    %192 = vmatpush1.msra.mxu0 0.0
    %193 = vmatprep.subr.mxu0 0.0
    %194 = vmatpush1.msra.mxu0 0.0
    %195 = vmatprep.subr.mxu0 0.0
    %196 = vmatpush1.msra.mxu0 0.0
    %197 = vmatprep.subr.mxu0 0.0
    %198 = vmatpush1.msra.mxu0 0.0
    %199 = vmatprep.subr.mxu0 0.0
    %200 = vmatpush1.msra.mxu0 0.0
    %201 = vmatprep.subr.mxu0 0.0
    %202 = vmatpush1.msra.mxu0 0.0
    %203 = vmatprep.subr.mxu0 0.0
    %204 = vmatpush1.msra.mxu0 0.0
    %205 = vmatprep.subr.mxu0 0.0
    %206 = vmatpush1.msra.mxu0 0.0
    %207 = vmatprep.subr.mxu0 0.0
    %208 = vmatpush1.msra.mxu0 0.0
    %209 = vmatprep.subr.mxu0 0.0
    %210 = vmatpush1.msra.mxu0 0.0
    %211 = vmatprep.subr.mxu0 0.0
    %212 = vmatpush1.msra.mxu0 0.0
    %213 = vmatprep.subr.mxu0 0.0
    %214 = vmatpush1.msra.mxu0 0.0
    %215 = vmatprep.subr.mxu0 0.0
    %216 = vmatpush1.msra.mxu0 0.0
    %217 = vmatprep.mubr.f32.mxu0 0.0
    %218 = vmatmul.mubr.f32.gmra.mrb[0].mxu0 %v151
    %v219 = vpop.f32.mrb[0].mxu0
    %v220 = vadd.f32 %v149, %v219
    %v221 = vpop.f32.mrb[0].mxu0
    %222 = vdwg.mxu0
    %vm223 = vcmask 261120
    %v224 = vsel %vm223, %v220, 0.0
    %225 = vadd.xlane.f32.xlu0 %v224
    %v226 = vpop.xlane.xlu0 %225
    %v227 = vmul.f32 %v226, 0.03125
    %v228 = vsub.f32 %v220, %v227
    %v229 = vmul.f32 %v228, %v228
    %v230 = vsel %vm223, %v229, 0.0
    %231 = vadd.xlane.f32.xlu0 %v230
    %v232 = vpop.xlane.xlu0 %231
    %v233 = vmul.f32 %v232, 0.03125
    %v234 = vadd.f32 %v233, 1e-05
    %v235 = vrsqrt.pop %v234
    %v236 = vmul.f32 %v228, %v235
    %v237 = vlaneseq
    %v238 = vshrl.u32 %v237, 7
    %v239 = vsub.s32 0, %v238
    %v240 = vrot.slane %v28, %v239
    %v241 = vmul.f32 %v236, %v240
    %v242 = vlaneseq
    %v243 = vshrl.u32 %v242, 7
    %v244 = vsub.s32 0, %v243
    %v245 = vrot.slane %v29, %v244
    %v246 = vadd.f32 %v241, %v245
    %v247 = vld [vmem:[%s3] sm:$0x3]
    %v248 = vlaneseq
    %v249 = vshrl.u32 %v248, 7
    %v250 = vsub.s32 0, %v249
    %v251 = vrot.slane %v30, %v250
    %252 = vrot.lane.b32.xlu0 %v33, 120
    %v253 = vpop.permute.xlu0 %252
    %vm254 = vcmask 15360
    %v255 = vsel %vm254, %v253, 0
    %vm257 = vcmask 1041408
    %v259 = vsel %vm257, %v247, 0
    %261 = vmatprep.subr.mxu0 0.0
    %262 = vmatpush1.msra.mxu0 %v259
    %263 = vmatprep.subr.mxu0 0.0
    %264 = vmatpush1.msra.mxu0 0.0
    %265 = vmatprep.subr.mxu0 0.0
    %266 = vmatpush1.msra.mxu0 0.0
    %267 = vmatprep.subr.mxu0 0.0
    %268 = vmatpush1.msra.mxu0 0.0
    %269 = vmatprep.subr.mxu0 0.0
    %270 = vmatpush1.msra.mxu0 0.0
    %271 = vmatprep.subr.mxu0 0.0
    %272 = vmatpush1.msra.mxu0 0.0
    %273 = vmatprep.subr.mxu0 0.0
    %274 = vmatpush1.msra.mxu0 0.0
    %275 = vmatprep.subr.mxu0 0.0
    %276 = vmatpush1.msra.mxu0 0.0
    %277 = vmatprep.subr.mxu0 0.0
    %278 = vmatpush1.msra.mxu0 0.0
    %279 = vmatprep.subr.mxu0 0.0
    %280 = vmatpush1.msra.mxu0 0.0
    %281 = vmatprep.subr.mxu0 0.0
    %282 = vmatpush1.msra.mxu0 0.0
    %283 = vmatprep.subr.mxu0 0.0
    %284 = vmatpush1.msra.mxu0 0.0
    %285 = vmatprep.subr.mxu0 0.0
    %286 = vmatpush1.msra.mxu0 0.0
    %287 = vmatprep.subr.mxu0 0.0
    %288 = vmatpush1.msra.mxu0 0.0
    %289 = vmatprep.subr.mxu0 0.0
    %290 = vmatpush1.msra.mxu0 0.0
    %291 = vmatprep.subr.mxu0 0.0
    %292 = vmatpush1.msra.mxu0 0.0
    %293 = vmatprep.subr.mxu0 0.0
    %294 = vmatpush1.msra.mxu0 0.0
    %295 = vmatprep.subr.mxu0 0.0
    %296 = vmatpush1.msra.mxu0 0.0
    %297 = vmatprep.subr.mxu0 0.0
    %298 = vmatpush1.msra.mxu0 0.0
    %299 = vmatprep.subr.mxu0 0.0
    %300 = vmatpush1.msra.mxu0 0.0
    %301 = vmatprep.subr.mxu0 0.0
    %302 = vmatpush1.msra.mxu0 0.0
    %303 = vmatprep.subr.mxu0 0.0
    %304 = vmatpush1.msra.mxu0 0.0
    %305 = vmatprep.subr.mxu0 0.0
    %306 = vmatpush1.msra.mxu0 0.0
    %307 = vmatprep.subr.mxu0 0.0
    %308 = vmatpush1.msra.mxu0 0.0
    %309 = vmatprep.subr.mxu0 0.0
    %310 = vmatpush1.msra.mxu0 0.0
    %311 = vmatprep.subr.mxu0 0.0
    %312 = vmatpush1.msra.mxu0 0.0
    %313 = vmatprep.subr.mxu0 0.0
    %314 = vmatpush1.msra.mxu0 0.0
    %315 = vmatprep.subr.mxu0 0.0
    %316 = vmatpush1.msra.mxu0 0.0
    %317 = vmatprep.subr.mxu0 0.0
    %318 = vmatpush1.msra.mxu0 0.0
    %319 = vmatprep.subr.mxu0 0.0
    %320 = vmatpush1.msra.mxu0 0.0
    %321 = vmatprep.subr.mxu0 0.0
    %322 = vmatpush1.msra.mxu0 0.0
    %323 = vmatprep.subr.mxu0 0.0
    %324 = vmatpush1.msra.mxu0 0.0
    %325 = vmatprep.mubr.f32.mxu0 0.0
    %326 = vmatmul.mubr.f32.gmra.mrb[0].mxu0 %v255
    %v327 = vpop.f32.mrb[0].mxu0
    %v328 = vadd.f32 %v251, %v327
    %v329 = vpop.f32.mrb[0].mxu0
    %330 = vdwg.mxu0
    %v331 = vadd.f32 %v246, %v328
    %v332 = vmax.f32 %v331, 0.0
    %334 = vset.pattern.permute.xlu0 0
    %335 = vperm.xlu0 %334, %v32
    %v336 = vpop.permute.xlu0 %335
    %v339 = vsel %vm223, %v31, 0
    %v342 = vsel %vm223, %v332, 0
    %344 = vmatprep.subr.mxu0 0.0
    %345 = vmatpush1.xpose.msra.mxu0 %v342
    %346 = vmatprep.subr.mxu0 0.0
    %347 = vmatpush1.xpose.msra.mxu0 0.0
    %348 = vmatprep.subr.mxu0 0.0
    %349 = vmatpush1.xpose.msra.mxu0 0.0
    %350 = vmatprep.subr.mxu0 0.0
    %351 = vmatpush1.xpose.msra.mxu0 0.0
    %352 = vmatprep.subr.mxu0 0.0
    %353 = vmatpush1.xpose.msra.mxu0 0.0
    %354 = vmatprep.subr.mxu0 0.0
    %355 = vmatpush1.xpose.msra.mxu0 0.0
    %356 = vmatprep.subr.mxu0 0.0
    %357 = vmatpush1.xpose.msra.mxu0 0.0
    %358 = vmatprep.subr.mxu0 0.0
    %359 = vmatpush1.xpose.msra.mxu0 0.0
    %360 = vmatprep.subr.mxu0 0.0
    %361 = vmatpush1.xpose.msra.mxu0 0.0
    %362 = vmatprep.subr.mxu0 0.0
    %363 = vmatpush1.xpose.msra.mxu0 0.0
    %364 = vmatprep.subr.mxu0 0.0
    %365 = vmatpush1.xpose.msra.mxu0 0.0
    %366 = vmatprep.subr.mxu0 0.0
    %367 = vmatpush1.xpose.msra.mxu0 0.0
    %368 = vmatprep.subr.mxu0 0.0
    %369 = vmatpush1.xpose.msra.mxu0 0.0
    %370 = vmatprep.subr.mxu0 0.0
    %371 = vmatpush1.xpose.msra.mxu0 0.0
    %372 = vmatprep.subr.mxu0 0.0
    %373 = vmatpush1.xpose.msra.mxu0 0.0
    %374 = vmatprep.subr.mxu0 0.0
    %375 = vmatpush1.xpose.msra.mxu0 0.0
    %376 = vmatprep.subr.mxu0 0.0
    %377 = vmatpush1.xpose.msra.mxu0 0.0
    %378 = vmatprep.subr.mxu0 0.0
    %379 = vmatpush1.xpose.msra.mxu0 0.0
    %380 = vmatprep.subr.mxu0 0.0
    %381 = vmatpush1.xpose.msra.mxu0 0.0
    %382 = vmatprep.subr.mxu0 0.0
    %383 = vmatpush1.xpose.msra.mxu0 0.0
    %384 = vmatprep.subr.mxu0 0.0
    %385 = vmatpush1.xpose.msra.mxu0 0.0
    %386 = vmatprep.subr.mxu0 0.0
    %387 = vmatpush1.xpose.msra.mxu0 0.0
    %388 = vmatprep.subr.mxu0 0.0
    %389 = vmatpush1.xpose.msra.mxu0 0.0
    %390 = vmatprep.subr.mxu0 0.0
    %391 = vmatpush1.xpose.msra.mxu0 0.0
    %392 = vmatprep.subr.mxu0 0.0
    %393 = vmatpush1.xpose.msra.mxu0 0.0
    %394 = vmatprep.subr.mxu0 0.0
    %395 = vmatpush1.xpose.msra.mxu0 0.0
    %396 = vmatprep.subr.mxu0 0.0
    %397 = vmatpush1.xpose.msra.mxu0 0.0
    %398 = vmatprep.subr.mxu0 0.0
    %399 = vmatpush1.xpose.msra.mxu0 0.0
    %400 = vmatprep.subr.mxu0 0.0
    %401 = vmatpush1.xpose.msra.mxu0 0.0
    %402 = vmatprep.subr.mxu0 0.0
    %403 = vmatpush1.xpose.msra.mxu0 0.0
    %404 = vmatprep.subr.mxu0 0.0
    %405 = vmatpush1.xpose.msra.mxu0 0.0
    %406 = vmatprep.subr.mxu0 0.0
    %407 = vmatpush1.xpose.msra.mxu0 0.0
    %408 = vmatprep.mubr.f32.mxu0 0.0
    %409 = vmatmul.mubr.f32.gmra.mrb[0].mxu0 %v339
    %v410 = vpop.f32.mrb[0].mxu0
    %v411 = vadd.f32 %v336, %v410
    %v412 = vpop.f32.mrb[0].mxu0
    %413 = vdwg.mxu0
    %vm414 = vcmask 57344
    %415 = vst.msk [vmem:[#allocation2] sm:$0x1] %vm414, %v411
    // Predicated region
    $region26: #{critic_forward.1} parent=1 // pred_check
      _
    $region27: #{critic_forward.1} parent=1 // pred_check_branch
      %417 = sbr.rel (0) target = $region29
    $region28: #{critic_forward.1} parent=1 // pred_region
      %s419 = ssub.s32 16, 16
      %420 = vsyncadd [#allocation3], %s419
      %s422 = sshll.u32 [#allocation2], 4
      %s423 = int_to_ptr.vmem [resolvable:$true] %s422
      %425 = dma.vmem_to_hbm [thread:$0]  %s423, 16, %s6, [#allocation3]
    $region29: #{critic_forward.1} parent=1 // pred_fallthru
      _
    // Predicated region
    $region30: #{critic_forward.1} parent=1 // pred_check
      _
    $region31: #{critic_forward.1} parent=1 // pred_check_branch
      %427 = sbr.rel (0) target = $region33
    $region32: #{critic_forward.1} parent=1 // pred_region
      %428 = dma.done [#allocation3], 16
    $region33: #{critic_forward.1} parent=1 // pred_fallthru
      _
    %429 = vsyncpa [#allocation3], 1

</llo_original>
